<compile_context>
chip_gen: v6e
topology: v6e:2x2x1
jax: 0.10.0
libtpu: 0.0.40
codegen_flags: <defaults>
</compile_context>

<pallas_src>
import jax
import jax.numpy as jnp
from jax.experimental import pallas as pl
from jax.experimental.pallas import tpu as pltpu

# Problem sizes (TPU-tile friendly: L multiple of 128, channels multiple of 8)
B = 2
C_IN = 8
C_OUT = 8      # channels produced by fn (pointwise Conv1d)
L = 2048       # sequence length


def residual_concat_kernel(x_ref, w_ref, b_ref, o_ref):
    # x_ref: (1, C_IN, l_tile)   w_ref: (C_OUT, C_IN)   b_ref: (C_OUT, 1)
    # o_ref: (1, C_OUT + C_IN, l_tile)
    x = x_ref[0]                                                   # (C_IN, l_tile)
    co = w_ref.shape[0]                                            # concat split point
    # fn(x): one wide MXU matmul per tile; bias add broadcasts (C_OUT,1) on the VPU.
    y = jnp.dot(w_ref[...], x, preferred_element_type=jnp.float32) + b_ref[...]
    # concat([fn(x), x], dim=1) — both stores are sublane-aligned (co % 8 == 0).
    o_ref[0, :co, :] = y.astype(o_ref.dtype)
    o_ref[0, co:, :] = x


def residual_concat(x, w, b):
    """out = concat([pointwise_conv1d(x, w, b), x], axis=1); x: (B, C_IN, L)."""
    Bn, Ci, Ln = x.shape
    Co = w.shape[0]
    assert Ci == w.shape[1]
    assert Ln % 128 == 0 and Ci % 8 == 0 and Co % 8 == 0

    # Full-sequence lane tile: grid = (B,).  The kernel is ~200 KiB of HBM traffic
    # per batch element, so per-grid-step overhead dominates; fewer steps is better.
    l_tile = Ln
    grid = (Bn,)

    b2d = b.reshape(Co, 1)

    out_shape = jax.ShapeDtypeStruct((Bn, Co + Ci, Ln), x.dtype)
    bytes_accessed = 4 * (Bn * Ci * Ln + Bn * (Co + Ci) * Ln + Co * Ci + Co)
    flops = 2 * Bn * Co * Ci * Ln

    return pl.pallas_call(
        residual_concat_kernel,
        out_shape=out_shape,
        grid_spec=pltpu.PrefetchScalarGridSpec(
            num_scalar_prefetch=0,
            grid=grid,
            in_specs=[
                pl.BlockSpec((1, Ci, l_tile), lambda bi: (bi, 0, 0)),
                pl.BlockSpec((Co, Ci), lambda bi: (0, 0)),   # resident (constant map)
                pl.BlockSpec((Co, 1), lambda bi: (0, 0)),    # resident (constant map)
            ],
            out_specs=pl.BlockSpec((1, Co + Ci, l_tile), lambda bi: (bi, 0, 0)),
        ),
        compiler_params=pltpu.CompilerParams(
            dimension_semantics=("parallel",),   # v7x: one batch element per TensorCore
        ),
        cost_estimate=pl.CostEstimate(
            flops=flops, transcendentals=0, bytes_accessed=bytes_accessed),
    )(x, w, b2d)


def reference(x, w, b):
    y = jnp.einsum("oc,bcl->bol", w, x) + b[None, :, :]   # fn(x): pointwise Conv1d
    return jnp.concatenate([y, x], axis=1)                # ResidualConcat


if __name__ == "__main__":
    key = jax.random.PRNGKey(0)
    kx, kw, kb = jax.random.split(key, 3)

    x = jax.random.normal(kx, (B, C_IN, L), dtype=jnp.float32)
    # deterministic parameters for the wrapped fn (pointwise Conv1d)
    w = jax.random.normal(kw, (C_OUT, C_IN), dtype=jnp.float32) * 0.1
    b = jax.random.normal(kb, (C_OUT, 1), dtype=jnp.float32) * 0.1

    out = residual_concat(x, w, b)
    out = jax.block_until_ready(out)

    ref = reference(x, w, b)
    assert out.shape == (B, C_OUT + C_IN, L), out.shape
    assert jnp.allclose(out, ref, atol=1e-5, rtol=1e-5), float(jnp.max(jnp.abs(out - ref)))

    print("KERNEL_OK")
</pallas_src>

<mosaic_0001>
module attributes {stable_mosaic.version = 11 : i64} {
  func.func @residual_concat_kernel(%arg0: i32, %arg1: memref<1x8x2048xf32, #tpu.memory_space<vmem>>, %arg2: memref<8x8xf32, #tpu.memory_space<vmem>>, %arg3: memref<8x1xf32, #tpu.memory_space<vmem>>, %arg4: memref<1x16x2048xf32, #tpu.memory_space<vmem>>) attributes {dimension_semantics = [#tpu.dimension_semantics<parallel>], iteration_bounds = array<i64: 2>, scalar_prefetch = 0 : i64, scratch_operands = 0 : i64, tpu.core_type = #tpu.core_type<tc>, window_params = [{transform_indices = @transform_0, window_bounds = array<i64: 1, 8, 2048>}, {pipeline_mode = #tpu.pipeline_mode<synchronous>, transform_indices = @transform_1, window_bounds = array<i64: 8, 8>}, {pipeline_mode = #tpu.pipeline_mode<synchronous>, transform_indices = @transform_2, window_bounds = array<i64: 8, 1>}, {transform_indices = @transform_3, window_bounds = array<i64: 1, 16, 2048>}]} {
    %c0 = arith.constant 0 : index
    %c0_0 = arith.constant 0 : index
    %c0_1 = arith.constant 0 : index
    %0 = vector.load %arg1[%c0, %c0_0, %c0_1] : memref<1x8x2048xf32, #tpu.memory_space<vmem>>, vector<1x8x2048xf32>
    %1 = vector.shape_cast %0 : vector<1x8x2048xf32> to vector<8x2048xf32>
    %c0_2 = arith.constant 0 : index
    %c0_3 = arith.constant 0 : index
    %2 = vector.load %arg2[%c0_2, %c0_3] : memref<8x8xf32, #tpu.memory_space<vmem>>, vector<8x8xf32>
    %cst = arith.constant dense<0.000000e+00> : vector<8x2048xf32>
    %3 = tpu.matmul %2, %1, %cst {dimension_numbers = #tpu.dot_dimension_numbers<[1], [0], [0], [1], [0, 0, 1, 1], [], []>} : vector<8x8xf32>, vector<8x2048xf32>, vector<8x2048xf32> -> vector<8x2048xf32>
    %c0_4 = arith.constant 0 : index
    %c0_5 = arith.constant 0 : index
    %4 = vector.load %arg3[%c0_4, %c0_5] : memref<8x1xf32, #tpu.memory_space<vmem>>, vector<8x1xf32>
    %5 = vector.broadcast %4 : vector<8x1xf32> to vector<8x2048xf32>
    %6 = arith.addf %3, %5 : vector<8x2048xf32>
    %c0_6 = arith.constant 0 : index
    %c0_7 = arith.constant 0 : index
    %c0_8 = arith.constant 0 : index
    %7 = vector.load %arg4[%c0_6, %c0_7, %c0_8] : memref<1x16x2048xf32, #tpu.memory_space<vmem>>, vector<1x8x2048xf32>
    %8 = vector.shape_cast %7 : vector<1x8x2048xf32> to vector<8x2048xf32>
    %9 = vector.shape_cast %6 : vector<8x2048xf32> to vector<1x8x2048xf32>
    tpu.vector_store %arg4[%c0_6, %c0_7, %c0_8], %9 {strides = array<i32>} : memref<1x16x2048xf32, #tpu.memory_space<vmem>>, vector<1x8x2048xf32>,
    %c0_9 = arith.constant 0 : index
    %c8 = arith.constant 8 : index
    %c0_10 = arith.constant 0 : index
    %10 = vector.load %arg4[%c0_9, %c8, %c0_10] : memref<1x16x2048xf32, #tpu.memory_space<vmem>>, vector<1x8x2048xf32>
    %11 = vector.shape_cast %10 : vector<1x8x2048xf32> to vector<8x2048xf32>
    %12 = vector.shape_cast %1 : vector<8x2048xf32> to vector<1x8x2048xf32>
    tpu.vector_store %arg4[%c0_9, %c8, %c0_10], %12 {strides = array<i32>} : memref<1x16x2048xf32, #tpu.memory_space<vmem>>, vector<1x8x2048xf32>,
    return
  }
  func.func @transform_0(%arg0: i32) -> (i32, i32, i32) {
    %c0_i32 = arith.constant 0 : i32
    %c0_i32_0 = arith.constant 0 : i32
    %c0_i32_1 = arith.constant 0 : i32
    return %arg0, %c0_i32, %c0_i32_0 : i32, i32, i32
  }
  func.func @transform_1(%arg0: i32) -> (i32, i32) {
    %c0_i32 = arith.constant 0 : i32
    %c0_i32_0 = arith.constant 0 : i32
    %c0_i32_1 = arith.constant 0 : i32
    return %c0_i32, %c0_i32_0 : i32, i32
  }
  func.func @transform_2(%arg0: i32) -> (i32, i32) {
    %c0_i32 = arith.constant 0 : i32
    %c0_i32_0 = arith.constant 0 : i32
    %c0_i32_1 = arith.constant 0 : i32
    return %c0_i32, %c0_i32_0 : i32, i32
  }
  func.func @transform_3(%arg0: i32) -> (i32, i32, i32) {
    %c0_i32 = arith.constant 0 : i32
    %c0_i32_0 = arith.constant 0 : i32
    %c0_i32_1 = arith.constant 0 : i32
    return %arg0, %c0_i32, %c0_i32_0 : i32, i32, i32
  }
}

</mosaic_0001>

<llo_original>
// kernel: tpu_custom_call.1
$region0: #{tpu_custom_call.1}
  #allocation0 [shape = 'u32[]', space=smem, size = 0x4, offset = 0x4, fixed_abs, tag = 'smem constant byte address 0x4 - core index']
  #allocation1 [shape = 'u32[144,128]{1,0:T(1,128)}', space=vmem, size = 0x12000, scoped, tag = 'internal scratch']
  %s0 = inlined_call_operand.hbm [shape: f32[2,8,2048], index: 0, kind: input, shape index: {}]
  %s1 = inlined_call_operand.vmem [shape: f32[8,8], index: 1, kind: input, shape index: {}]
  %s2 = inlined_call_operand.vmem [shape: f32[8,1], index: 2, kind: input, shape index: {}]
  %s3 = inlined_call_operand.hbm [shape: f32[2,16,2048], index: 3, kind: output, shape index: {}]
  %s4 = sld [smem:[#allocation0]]
  $region49: #{tpu_custom_call.1} parent=0
    _
  %s6 = ssub.s32 1, %s4
  %s7 = scalar_select 0, %s6, %s4
  $region1: #{tpu_custom_call.1} parent=0
    #allocation2 [shape = 'u8[131072]{0}', space=vmem, size = 0x20000, scoped, tag = 'input window, operand 0']
    #allocation3 [shape = 's32[2]{0}', space=sflag, size = 0x8, scoped, tag = 'scoped memory for tpu_custom_call.1']
    #allocation4 [shape = 's32[2]{0}', space=sflag, size = 0x8, scoped, tag = 'scoped memory for tpu_custom_call.1']
    #allocation5 [shape = 'u8[262144]{0}', space=vmem, size = 0x40000, scoped, tag = 'output window, operand 0']
    %8 = vsyncpa [#allocation3], 0
    %s9 = scalar_lea.sflag [#allocation3], 1
    %10 = vsyncpa %s9, 0
    %11 = vsyncpa [#allocation4], 0
    %s12 = scalar_lea.sflag [#allocation4], 1
    %13 = vsyncpa %s12, 0
    loop: start=0, step=1, limit=4
    $region2: #{tpu_custom_call.1} parent=1 // loop_pre_header
      _
    $region3: #{tpu_custom_call.1} parent=1 // loop_header
      %s15 = sphi 0, %s19
      %p16 = scmp.ge.s32.totalorder %s15, 4
      %s25 = sphi 0, %s27
      %s28 = sphi 0, %s25
      %s29 = sphi 0, %s28
      %s45 = sphi 0, %s29
      %s49 = sphi 0, %s49
      %s51 = sphi 0, %s49
      %s52 = sphi 0, %s51
      %s66 = sphi 0, %s52
      %s70 = sphi 0, %s70
      %s72 = sphi 0, %s70
      %s73 = sphi 0, %s72
      %s87 = sphi 0, %s73
      %s93 = sphi 0, %s95
      %s96 = sphi 0, %s93
      %s97 = sphi 0, %s96
      %s113 = sphi 0, %s97
    $region4: #{tpu_custom_call.1} parent=1 // loop_header_branch
      %18 = sbr.rel (%p16) target = $region8
    $region5: #{tpu_custom_call.1} parent=1 // loop_body
      %s20 = ssub.s32 %s15, 1
      %s21 = ssub.s32 %s15, 2
      %s22 = sadd.s32 %s15, 1
      %s23 = ssub.s32 %s15, %s22
      %p24 = scmp.eq.s32.totalorder %s23, 0
      %s26 = sadd.s32 %s25, 1
      %s27 = scalar_select %p24, %s25, %s26
      %p30 = pneg %p24
      %p31 = scmp.eq.s32.totalorder %s15, 1
      %p32 = por %p30, %p31
      %p33 = scmp.ne.s32.totalorder %s25, %s28
      %p34 = scmp.eq.s32.totalorder %s15, 0
      %p35 = por %p33, %p34
      %p36 = scmp.ne.s32.totalorder %s25, %s28
      %p37 = scmp.eq.s32.totalorder %s20, 1
      %p38 = por %p36, %p37
      %p39 = scmp.ne.s32.totalorder %s28, %s29
      %p40 = scmp.eq.s32.totalorder %s20, 0
      %p41 = por %p39, %p40
      %p42 = scmp.ne.s32.totalorder %s28, %s29
      %p43 = scmp.eq.s32.totalorder %s21, 1
      %p44 = por %p42, %p43
      %p46 = scmp.ne.s32.totalorder %s29, %s45
      %p47 = scmp.eq.s32.totalorder %s21, 0
      %p48 = por %p46, %p47
      %s50 = sadd.s32 %s49, 1
      %p53 = scmp.eq.s32.totalorder %s15, 1
      %p54 = scmp.ne.s32.totalorder %s49, %s51
      %p55 = scmp.eq.s32.totalorder %s15, 0
      %p56 = por %p54, %p55
      %p57 = scmp.ne.s32.totalorder %s49, %s51
      %p58 = scmp.eq.s32.totalorder %s20, 1
      %p59 = por %p57, %p58
      %p60 = scmp.ne.s32.totalorder %s51, %s52
      %p61 = scmp.eq.s32.totalorder %s20, 0
      %p62 = por %p60, %p61
      %p63 = scmp.ne.s32.totalorder %s51, %s52
      %p64 = scmp.eq.s32.totalorder %s21, 1
      %p65 = por %p63, %p64
      %p67 = scmp.ne.s32.totalorder %s52, %s66
      %p68 = scmp.eq.s32.totalorder %s21, 0
      %p69 = por %p67, %p68
      %s71 = sadd.s32 %s70, 1
      %p74 = scmp.eq.s32.totalorder %s15, 1
      %p75 = scmp.ne.s32.totalorder %s70, %s72
      %p76 = scmp.eq.s32.totalorder %s15, 0
      %p77 = por %p75, %p76
      %p78 = scmp.ne.s32.totalorder %s70, %s72
      %p79 = scmp.eq.s32.totalorder %s20, 1
      %p80 = por %p78, %p79
      %p81 = scmp.ne.s32.totalorder %s72, %s73
      %p82 = scmp.eq.s32.totalorder %s20, 0
      %p83 = por %p81, %p82
      %p84 = scmp.ne.s32.totalorder %s72, %s73
      %p85 = scmp.eq.s32.totalorder %s21, 1
      %p86 = por %p84, %p85
      %p88 = scmp.ne.s32.totalorder %s73, %s87
      %p89 = scmp.eq.s32.totalorder %s21, 0
      %p90 = por %p88, %p89
      %s91 = ssub.s32 %s15, %s22
      %p92 = scmp.eq.s32.totalorder %s91, 0
      %s94 = sadd.s32 %s93, 1
      %s95 = scalar_select %p92, %s93, %s94
      %p98 = pneg %p92
      %p99 = scmp.eq.s32.totalorder %s15, 1
      %p100 = por %p98, %p99
      %p101 = scmp.ne.s32.totalorder %s93, %s96
      %p102 = scmp.eq.s32.totalorder %s15, 0
      %p103 = por %p101, %p102
      %p104 = scmp.ne.s32.totalorder %s93, %s96
      %p105 = scmp.eq.s32.totalorder %s20, 1
      %p106 = por %p104, %p105
      %p107 = scmp.ne.s32.totalorder %s96, %s97
      %p108 = scmp.eq.s32.totalorder %s20, 0
      %p109 = por %p107, %p108
      %p110 = scmp.ne.s32.totalorder %s96, %s97
      %p111 = scmp.eq.s32.totalorder %s21, 1
      %p112 = por %p110, %p111
      %p114 = scmp.ne.s32.totalorder %s97, %s113
      %p115 = scmp.eq.s32.totalorder %s21, 0
      %p116 = por %p114, %p115
      %p117 = scmp.le.s32.totalorder 1, %s15
      %p118 = scmp.lt.s32.totalorder %s15, 3
      %p119 = pnand %p117, %p118
      %p120 = pneg %p119
      // Predicated region
      $region9: #{tpu_custom_call.1} parent=5 // pred_check
        _
      $region10: #{tpu_custom_call.1} parent=5 // pred_check_branch
        %122 = sbr.rel (%p119) target = $region12
      $region11: #{tpu_custom_call.1} parent=5 // pred_region
        %s123 = ssub.s32 %s15, 1
        // Predicated region
        $region13: #{tpu_custom_call.1} parent=11 // pred_check
          %p124 = pneg %p62
        $region14: #{tpu_custom_call.1} parent=11 // pred_check_branch
          %126 = sbr.rel (%p124) target = $region16
        $region15: #{tpu_custom_call.1} parent=11 // pred_region
          _
        $region16: #{tpu_custom_call.1} parent=11 // pred_fallthru
          _
        // Predicated region
        $region17: #{tpu_custom_call.1} parent=11 // pred_check
          %p127 = pneg %p83
        $region18: #{tpu_custom_call.1} parent=11 // pred_check_branch
          %129 = sbr.rel (%p127) target = $region20
        $region19: #{tpu_custom_call.1} parent=11 // pred_region
          _
        $region20: #{tpu_custom_call.1} parent=11 // pred_fallthru
          _
      $region12: #{tpu_custom_call.1} parent=5 // pred_fallthru
        _
      %p130 = scmp.lt.s32.totalorder %s15, 2
      // Predicated region
      $region21: #{tpu_custom_call.1} parent=5 // pred_check
        %p131 = pneg %p130
      $region22: #{tpu_custom_call.1} parent=5 // pred_check_branch
        %133 = sbr.rel (%p131) target = $region24
      $region23: #{tpu_custom_call.1} parent=5 // pred_region
        // Predicated region
        $region25: #{tpu_custom_call.1} parent=23 // pred_check
          %p134 = pneg %p35
        $region26: #{tpu_custom_call.1} parent=23 // pred_check_branch
          %136 = sbr.rel (%p134) target = $region28
        $region27: #{tpu_custom_call.1} parent=23 // pred_region
          %s137 = sand.u32 %s25, 1
          %s138 = scalar_lea.sflag [#allocation3], %s137
          %s139 = sand.u32 %s25, 1
          %s140 = smul.addr %s139, 128
          %s141 = scalar_lea.vmem [#allocation2], %s140
          %s143 = ssub.s32 2048, 2048
          %144 = vsyncadd %s138, %s143
          %s145 = smul.addr %s15, 16
          %s146 = smul.addr %s145, 128
          %s147 = scalar_lea.hbm %s0, %s146
          %s149 = sshll.u32 %s141, 4
          %s150 = int_to_ptr.vmem [resolvable:$true] %s149
          %152 = dma.hbm_to_vmem [thread:$0]  %s147, 2048, %s150, %s138
        $region28: #{tpu_custom_call.1} parent=23 // pred_fallthru
          _
      $region24: #{tpu_custom_call.1} parent=5 // pred_fallthru
        _
      %p153 = scmp.le.s32.totalorder 1, %s15
      %p154 = scmp.lt.s32.totalorder %s15, 3
      %p155 = pnand %p153, %p154
      %p156 = pneg %p155
      // Predicated region
      $region29: #{tpu_custom_call.1} parent=5 // pred_check
        _
      $region30: #{tpu_custom_call.1} parent=5 // pred_check_branch
        %158 = sbr.rel (%p155) target = $region32
      $region31: #{tpu_custom_call.1} parent=5 // pred_region
        %s159 = ssub.s32 %s15, 1
        %s160 = sand.u32 %s28, 1
        %s161 = scalar_lea.sflag [#allocation3], %s160
        %s162 = sand.u32 %s28, 1
        %s163 = smul.addr %s162, 128
        %s164 = scalar_lea.vmem [#allocation2], %s163
        // Predicated region
        $region33: #{tpu_custom_call.1} parent=31 // pred_check
          %p165 = pneg %p41
        $region34: #{tpu_custom_call.1} parent=31 // pred_check_branch
          %167 = sbr.rel (%p165) target = $region36
        $region35: #{tpu_custom_call.1} parent=31 // pred_region
          %168 = dma.done %s161, 2048
        $region36: #{tpu_custom_call.1} parent=31 // pred_fallthru
          _
        %s169 = sand.u32 %s28, 1
        %s170 = scalar_lea.sflag [#allocation3], %s169
        %s171 = sand.u32 %s28, 1
        %s172 = smul.addr %s171, 128
        %s173 = scalar_lea.vmem [#allocation2], %s172
        %p174 = pneg %p41
        %p175 = pneg %p38
        %p176 = pneg %p62
        %p177 = pneg %p59
        %p178 = pneg %p83
        %p179 = pneg %p80
        %p180 = pneg %p109
        %p181 = pneg %p106
        %s182 = sand.u32 %s96, 1
        %s183 = scalar_lea.sflag [#allocation4], %s182
        %s184 = sand.u32 %s96, 1
        %s185 = smul.addr %s184, 256
        %s186 = scalar_lea.vmem [#allocation5], %s185
        %v187 = vld [vmem:[%s164] sm:$0xff]
        %v188 = vld [vmem:[%s164 + $0x8] sm:$0xff]
        %v189 = vld [vmem:[%s164 + $0x10] sm:$0xff]
        %v190 = vld [vmem:[%s164 + $0x18] sm:$0xff]
        %v191 = vld [vmem:[%s164 + $0x20] sm:$0xff]
        %v192 = vld [vmem:[%s164 + $0x28] sm:$0xff]
        %v193 = vld [vmem:[%s164 + $0x30] sm:$0xff]
        %v194 = vld [vmem:[%s164 + $0x38] sm:$0xff]
        %v195 = vld [vmem:[%s164 + $0x40] sm:$0xff]
        %v196 = vld [vmem:[%s164 + $0x48] sm:$0xff]
        %v197 = vld [vmem:[%s164 + $0x50] sm:$0xff]
        %v198 = vld [vmem:[%s164 + $0x58] sm:$0xff]
        %v199 = vld [vmem:[%s164 + $0x60] sm:$0xff]
        %v200 = vld [vmem:[%s164 + $0x68] sm:$0xff]
        %v201 = vld [vmem:[%s164 + $0x70] sm:$0xff]
        %v202 = vld [vmem:[%s164 + $0x78] sm:$0xff]
        %v203 = vld [vmem:[%s1] sm:$0xff]
        %v204 = vld [vmem:[%s2] sm:$0xff]
        %206 = vset.pattern.permute.xlu0 0
        %207 = vperm.xlu0 %206, %v204
        %v208 = vpop.permute.xlu0 %207
        %vm210 = vcmask 64512
        %v212 = vsel %vm210, %v203, 0
        %214 = vmatprep.subr.mxu0 0.0
        %215 = vmatpush1.msra.mxu0 0.0
        %216 = vmatprep.subr.mxu0 0.0
        %217 = vmatpush1.msra.mxu0 0.0
        %218 = vmatprep.subr.mxu0 0.0
        %219 = vmatpush1.msra.mxu0 0.0
        %220 = vmatprep.subr.mxu0 0.0
        %221 = vmatpush1.msra.mxu0 0.0
        %222 = vmatprep.subr.mxu0 0.0
        %223 = vmatpush1.msra.mxu0 0.0
        %224 = vmatprep.subr.mxu0 0.0
        %225 = vmatpush1.msra.mxu0 0.0
        %226 = vmatprep.subr.mxu0 0.0
        %227 = vmatpush1.msra.mxu0 0.0
        %228 = vmatprep.subr.mxu0 0.0
        %229 = vmatpush1.msra.mxu0 0.0
        %230 = vmatprep.subr.mxu0 0.0
        %231 = vmatpush1.msra.mxu0 0.0
        %232 = vmatprep.subr.mxu0 0.0
        %233 = vmatpush1.msra.mxu0 0.0
        %234 = vmatprep.subr.mxu0 0.0
        %235 = vmatpush1.msra.mxu0 0.0
        %236 = vmatprep.subr.mxu0 0.0
        %237 = vmatpush1.msra.mxu0 0.0
        %238 = vmatprep.subr.mxu0 0.0
        %239 = vmatpush1.msra.mxu0 0.0
        %240 = vmatprep.subr.mxu0 0.0
        %241 = vmatpush1.msra.mxu0 0.0
        %242 = vmatprep.subr.mxu0 0.0
        %243 = vmatpush1.msra.mxu0 0.0
        %244 = vmatprep.subr.mxu0 %v188
        %245 = vmatpush1.msra.mxu0 %v187
        %246 = vmatprep.subr.mxu0 0.0
        %247 = vmatpush2.msra.mxu0 0.0
        %248 = vmatprep.subr.mxu0 0.0
        %249 = vmatpush2.msra.mxu0 0.0
        %250 = vmatprep.subr.mxu0 0.0
        %251 = vmatpush2.msra.mxu0 0.0
        %252 = vmatprep.subr.mxu0 0.0
        %253 = vmatpush2.msra.mxu0 0.0
        %254 = vmatprep.subr.mxu0 0.0
        %255 = vmatpush2.msra.mxu0 0.0
        %256 = vmatprep.subr.mxu0 0.0
        %257 = vmatpush2.msra.mxu0 0.0
        %258 = vmatprep.subr.mxu0 0.0
        %259 = vmatpush2.msra.mxu0 0.0
        %260 = vmatprep.subr.mxu0 0.0
        %261 = vmatpush2.msra.mxu0 0.0
        %262 = vmatprep.subr.mxu0 0.0
        %263 = vmatpush2.msra.mxu0 0.0
        %264 = vmatprep.subr.mxu0 0.0
        %265 = vmatpush2.msra.mxu0 0.0
        %266 = vmatprep.subr.mxu0 0.0
        %267 = vmatpush2.msra.mxu0 0.0
        %268 = vmatprep.subr.mxu0 0.0
        %269 = vmatpush2.msra.mxu0 0.0
        %270 = vmatprep.subr.mxu0 0.0
        %271 = vmatpush2.msra.mxu0 0.0
        %272 = vmatprep.subr.mxu0 0.0
        %273 = vmatpush2.msra.mxu0 0.0
        %274 = vmatprep.subr.mxu0 0.0
        %275 = vmatpush2.msra.mxu0 0.0
        %276 = vmatprep.subr.mxu0 0.0
        %277 = vmatpush2.msra.mxu0 0.0
        %278 = vmatprep.mubr.f32.mxu0 0.0
        %279 = vmatmul.mubr.f32.gmra.mxu0 %v212
        %v280 = vpop.f32.mrf.mxu0
        %v281 = vadd.f32 %v208, %v280
        %v282 = vpop.f32.mrf.mxu0
        %v283 = vadd.f32 %v208, %v282
        %284 = vdwg.mxu0
        %285 = vmatprep.subr.mxu0 0.0
        %286 = vmatpush1.msra.mxu0 0.0
        %287 = vmatprep.subr.mxu0 0.0
        %288 = vmatpush1.msra.mxu0 0.0
        %289 = vmatprep.subr.mxu0 0.0
        %290 = vmatpush1.msra.mxu0 0.0
        %291 = vmatprep.subr.mxu0 0.0
        %292 = vmatpush1.msra.mxu0 0.0
        %293 = vmatprep.subr.mxu0 0.0
        %294 = vmatpush1.msra.mxu0 0.0
        %295 = vmatprep.subr.mxu0 0.0
        %296 = vmatpush1.msra.mxu0 0.0
        %297 = vmatprep.subr.mxu0 0.0
        %298 = vmatpush1.msra.mxu0 0.0
        %299 = vmatprep.subr.mxu0 0.0
        %300 = vmatpush1.msra.mxu0 0.0
        %301 = vmatprep.subr.mxu0 0.0
        %302 = vmatpush1.msra.mxu0 0.0
        %303 = vmatprep.subr.mxu0 0.0
        %304 = vmatpush1.msra.mxu0 0.0
        %305 = vmatprep.subr.mxu0 0.0
        %306 = vmatpush1.msra.mxu0 0.0
        %307 = vmatprep.subr.mxu0 0.0
        %308 = vmatpush1.msra.mxu0 0.0
        %309 = vmatprep.subr.mxu0 0.0
        %310 = vmatpush1.msra.mxu0 0.0
        %311 = vmatprep.subr.mxu0 0.0
        %312 = vmatpush1.msra.mxu0 0.0
        %313 = vmatprep.subr.mxu0 0.0
        %314 = vmatpush1.msra.mxu0 0.0
        %315 = vmatprep.subr.mxu0 %v190
        %316 = vmatpush1.msra.mxu0 %v189
        %317 = vmatprep.subr.mxu0 0.0
        %318 = vmatpush2.msra.mxu0 0.0
        %319 = vmatprep.subr.mxu0 0.0
        %320 = vmatpush2.msra.mxu0 0.0
        %321 = vmatprep.subr.mxu0 0.0
        %322 = vmatpush2.msra.mxu0 0.0
        %323 = vmatprep.subr.mxu0 0.0
        %324 = vmatpush2.msra.mxu0 0.0
        %325 = vmatprep.subr.mxu0 0.0
        %326 = vmatpush2.msra.mxu0 0.0
        %327 = vmatprep.subr.mxu0 0.0
        %328 = vmatpush2.msra.mxu0 0.0
        %329 = vmatprep.subr.mxu0 0.0
        %330 = vmatpush2.msra.mxu0 0.0
        %331 = vmatprep.subr.mxu0 0.0
        %332 = vmatpush2.msra.mxu0 0.0
        %333 = vmatprep.subr.mxu0 0.0
        %334 = vmatpush2.msra.mxu0 0.0
        %335 = vmatprep.subr.mxu0 0.0
        %336 = vmatpush2.msra.mxu0 0.0
        %337 = vmatprep.subr.mxu0 0.0
        %338 = vmatpush2.msra.mxu0 0.0
        %339 = vmatprep.subr.mxu0 0.0
        %340 = vmatpush2.msra.mxu0 0.0
        %341 = vmatprep.subr.mxu0 0.0
        %342 = vmatpush2.msra.mxu0 0.0
        %343 = vmatprep.subr.mxu0 0.0
        %344 = vmatpush2.msra.mxu0 0.0
        %345 = vmatprep.subr.mxu0 0.0
        %346 = vmatpush2.msra.mxu0 0.0
        %347 = vmatprep.subr.mxu0 0.0
        %348 = vmatpush2.msra.mxu0 0.0
        %349 = vmatprep.mubr.f32.mxu0 0.0
        %350 = vmatmul.mubr.f32.gmra.mxu0 %v212
        %v351 = vpop.f32.mrf.mxu0
        %v352 = vadd.f32 %v208, %v351
        %v353 = vpop.f32.mrf.mxu0
        %v354 = vadd.f32 %v208, %v353
        %355 = vdwg.mxu0
        %356 = vmatprep.subr.mxu0 0.0
        %357 = vmatpush1.msra.mxu0 0.0
        %358 = vmatprep.subr.mxu0 0.0
        %359 = vmatpush1.msra.mxu0 0.0
        %360 = vmatprep.subr.mxu0 0.0
        %361 = vmatpush1.msra.mxu0 0.0
        %362 = vmatprep.subr.mxu0 0.0
        %363 = vmatpush1.msra.mxu0 0.0
        %364 = vmatprep.subr.mxu0 0.0
        %365 = vmatpush1.msra.mxu0 0.0
        %366 = vmatprep.subr.mxu0 0.0
        %367 = vmatpush1.msra.mxu0 0.0
        %368 = vmatprep.subr.mxu0 0.0
        %369 = vmatpush1.msra.mxu0 0.0
        %370 = vmatprep.subr.mxu0 0.0
        %371 = vmatpush1.msra.mxu0 0.0
        %372 = vmatprep.subr.mxu0 0.0
        %373 = vmatpush1.msra.mxu0 0.0
        %374 = vmatprep.subr.mxu0 0.0
        %375 = vmatpush1.msra.mxu0 0.0
        %376 = vmatprep.subr.mxu0 0.0
        %377 = vmatpush1.msra.mxu0 0.0
        %378 = vmatprep.subr.mxu0 0.0
        %379 = vmatpush1.msra.mxu0 0.0
        %380 = vmatprep.subr.mxu0 0.0
        %381 = vmatpush1.msra.mxu0 0.0
        %382 = vmatprep.subr.mxu0 0.0
        %383 = vmatpush1.msra.mxu0 0.0
        %384 = vmatprep.subr.mxu0 0.0
        %385 = vmatpush1.msra.mxu0 0.0
        %386 = vmatprep.subr.mxu0 %v192
        %387 = vmatpush1.msra.mxu0 %v191
        %388 = vmatprep.subr.mxu0 0.0
        %389 = vmatpush2.msra.mxu0 0.0
        %390 = vmatprep.subr.mxu0 0.0
        %391 = vmatpush2.msra.mxu0 0.0
        %392 = vmatprep.subr.mxu0 0.0
        %393 = vmatpush2.msra.mxu0 0.0
        %394 = vmatprep.subr.mxu0 0.0
        %395 = vmatpush2.msra.mxu0 0.0
        %396 = vmatprep.subr.mxu0 0.0
        %397 = vmatpush2.msra.mxu0 0.0
        %398 = vmatprep.subr.mxu0 0.0
        %399 = vmatpush2.msra.mxu0 0.0
        %400 = vmatprep.subr.mxu0 0.0
        %401 = vmatpush2.msra.mxu0 0.0
        %402 = vmatprep.subr.mxu0 0.0
        %403 = vmatpush2.msra.mxu0 0.0
        %404 = vmatprep.subr.mxu0 0.0
        %405 = vmatpush2.msra.mxu0 0.0
        %406 = vmatprep.subr.mxu0 0.0
        %407 = vmatpush2.msra.mxu0 0.0
        %408 = vmatprep.subr.mxu0 0.0
        %409 = vmatpush2.msra.mxu0 0.0
        %410 = vmatprep.subr.mxu0 0.0
        %411 = vmatpush2.msra.mxu0 0.0
        %412 = vmatprep.subr.mxu0 0.0
        %413 = vmatpush2.msra.mxu0 0.0
        %414 = vmatprep.subr.mxu0 0.0
        %415 = vmatpush2.msra.mxu0 0.0
        %416 = vmatprep.subr.mxu0 0.0
        %417 = vmatpush2.msra.mxu0 0.0
        %418 = vmatprep.subr.mxu0 0.0
        %419 = vmatpush2.msra.mxu0 0.0
        %420 = vmatprep.mubr.f32.mxu0 0.0
        %421 = vmatmul.mubr.f32.gmra.mxu0 %v212
        %v422 = vpop.f32.mrf.mxu0
        %v423 = vadd.f32 %v208, %v422
        %v424 = vpop.f32.mrf.mxu0
        %v425 = vadd.f32 %v208, %v424
        %426 = vdwg.mxu0
        %427 = vmatprep.subr.mxu0 0.0
        %428 = vmatpush1.msra.mxu0 0.0
        %429 = vmatprep.subr.mxu0 0.0
        %430 = vmatpush1.msra.mxu0 0.0
        %431 = vmatprep.subr.mxu0 0.0
        %432 = vmatpush1.msra.mxu0 0.0
        %433 = vmatprep.subr.mxu0 0.0
        %434 = vmatpush1.msra.mxu0 0.0
        %435 = vmatprep.subr.mxu0 0.0
        %436 = vmatpush1.msra.mxu0 0.0
        %437 = vmatprep.subr.mxu0 0.0
        %438 = vmatpush1.msra.mxu0 0.0
        %439 = vmatprep.subr.mxu0 0.0
        %440 = vmatpush1.msra.mxu0 0.0
        %441 = vmatprep.subr.mxu0 0.0
        %442 = vmatpush1.msra.mxu0 0.0
        %443 = vmatprep.subr.mxu0 0.0
        %444 = vmatpush1.msra.mxu0 0.0
        %445 = vmatprep.subr.mxu0 0.0
        %446 = vmatpush1.msra.mxu0 0.0
        %447 = vmatprep.subr.mxu0 0.0
        %448 = vmatpush1.msra.mxu0 0.0
        %449 = vmatprep.subr.mxu0 0.0
        %450 = vmatpush1.msra.mxu0 0.0
        %451 = vmatprep.subr.mxu0 0.0
        %452 = vmatpush1.msra.mxu0 0.0
        %453 = vmatprep.subr.mxu0 0.0
        %454 = vmatpush1.msra.mxu0 0.0
        %455 = vmatprep.subr.mxu0 0.0
        %456 = vmatpush1.msra.mxu0 0.0
        %457 = vmatprep.subr.mxu0 %v194
        %458 = vmatpush1.msra.mxu0 %v193
        %459 = vmatprep.subr.mxu0 0.0
        %460 = vmatpush2.msra.mxu0 0.0
        %461 = vmatprep.subr.mxu0 0.0
        %462 = vmatpush2.msra.mxu0 0.0
        %463 = vmatprep.subr.mxu0 0.0
        %464 = vmatpush2.msra.mxu0 0.0
        %465 = vmatprep.subr.mxu0 0.0
        %466 = vmatpush2.msra.mxu0 0.0
        %467 = vmatprep.subr.mxu0 0.0
        %468 = vmatpush2.msra.mxu0 0.0
        %469 = vmatprep.subr.mxu0 0.0
        %470 = vmatpush2.msra.mxu0 0.0
        %471 = vmatprep.subr.mxu0 0.0
        %472 = vmatpush2.msra.mxu0 0.0
        %473 = vmatprep.subr.mxu0 0.0
        %474 = vmatpush2.msra.mxu0 0.0
        %475 = vmatprep.subr.mxu0 0.0
        %476 = vmatpush2.msra.mxu0 0.0
        %477 = vmatprep.subr.mxu0 0.0
        %478 = vmatpush2.msra.mxu0 0.0
        %479 = vmatprep.subr.mxu0 0.0
        %480 = vmatpush2.msra.mxu0 0.0
        %481 = vmatprep.subr.mxu0 0.0
        %482 = vmatpush2.msra.mxu0 0.0
        %483 = vmatprep.subr.mxu0 0.0
        %484 = vmatpush2.msra.mxu0 0.0
        %485 = vmatprep.subr.mxu0 0.0
        %486 = vmatpush2.msra.mxu0 0.0
        %487 = vmatprep.subr.mxu0 0.0
        %488 = vmatpush2.msra.mxu0 0.0
        %489 = vmatprep.subr.mxu0 0.0
        %490 = vmatpush2.msra.mxu0 0.0
        %491 = vmatprep.mubr.f32.mxu0 0.0
        %492 = vmatmul.mubr.f32.gmra.mxu0 %v212
        %v493 = vpop.f32.mrf.mxu0
        %v494 = vadd.f32 %v208, %v493
        %v495 = vpop.f32.mrf.mxu0
        %v496 = vadd.f32 %v208, %v495
        %497 = vdwg.mxu0
        %498 = vmatprep.subr.mxu0 0.0
        %499 = vmatpush1.msra.mxu0 0.0
        %500 = vmatprep.subr.mxu0 0.0
        %501 = vmatpush1.msra.mxu0 0.0
        %502 = vmatprep.subr.mxu0 0.0
        %503 = vmatpush1.msra.mxu0 0.0
        %504 = vmatprep.subr.mxu0 0.0
        %505 = vmatpush1.msra.mxu0 0.0
        %506 = vmatprep.subr.mxu0 0.0
        %507 = vmatpush1.msra.mxu0 0.0
        %508 = vmatprep.subr.mxu0 0.0
        %509 = vmatpush1.msra.mxu0 0.0
        %510 = vmatprep.subr.mxu0 0.0
        %511 = vmatpush1.msra.mxu0 0.0
        %512 = vmatprep.subr.mxu0 0.0
        %513 = vmatpush1.msra.mxu0 0.0
        %514 = vmatprep.subr.mxu0 0.0
        %515 = vmatpush1.msra.mxu0 0.0
        %516 = vmatprep.subr.mxu0 0.0
        %517 = vmatpush1.msra.mxu0 0.0
        %518 = vmatprep.subr.mxu0 0.0
        %519 = vmatpush1.msra.mxu0 0.0
        %520 = vmatprep.subr.mxu0 0.0
        %521 = vmatpush1.msra.mxu0 0.0
        %522 = vmatprep.subr.mxu0 0.0
        %523 = vmatpush1.msra.mxu0 0.0
        %524 = vmatprep.subr.mxu0 0.0
        %525 = vmatpush1.msra.mxu0 0.0
        %526 = vmatprep.subr.mxu0 0.0
        %527 = vmatpush1.msra.mxu0 0.0
        %528 = vmatprep.subr.mxu0 %v196
        %529 = vmatpush1.msra.mxu0 %v195
        %530 = vmatprep.subr.mxu0 0.0
        %531 = vmatpush2.msra.mxu0 0.0
        %532 = vmatprep.subr.mxu0 0.0
        %533 = vmatpush2.msra.mxu0 0.0
        %534 = vmatprep.subr.mxu0 0.0
        %535 = vmatpush2.msra.mxu0 0.0
        %536 = vmatprep.subr.mxu0 0.0
        %537 = vmatpush2.msra.mxu0 0.0
        %538 = vmatprep.subr.mxu0 0.0
        %539 = vmatpush2.msra.mxu0 0.0
        %540 = vmatprep.subr.mxu0 0.0
        %541 = vmatpush2.msra.mxu0 0.0
        %542 = vmatprep.subr.mxu0 0.0
        %543 = vmatpush2.msra.mxu0 0.0
        %544 = vmatprep.subr.mxu0 0.0
        %545 = vmatpush2.msra.mxu0 0.0
        %546 = vmatprep.subr.mxu0 0.0
        %547 = vmatpush2.msra.mxu0 0.0
        %548 = vmatprep.subr.mxu0 0.0
        %549 = vmatpush2.msra.mxu0 0.0
        %550 = vmatprep.subr.mxu0 0.0
        %551 = vmatpush2.msra.mxu0 0.0
        %552 = vmatprep.subr.mxu0 0.0
        %553 = vmatpush2.msra.mxu0 0.0
        %554 = vmatprep.subr.mxu0 0.0
        %555 = vmatpush2.msra.mxu0 0.0
        %556 = vmatprep.subr.mxu0 0.0
        %557 = vmatpush2.msra.mxu0 0.0
        %558 = vmatprep.subr.mxu0 0.0
        %559 = vmatpush2.msra.mxu0 0.0
        %560 = vmatprep.subr.mxu0 0.0
        %561 = vmatpush2.msra.mxu0 0.0
        %562 = vmatprep.mubr.f32.mxu0 0.0
        %563 = vmatmul.mubr.f32.gmra.mxu0 %v212
        %v564 = vpop.f32.mrf.mxu0
        %v565 = vadd.f32 %v208, %v564
        %v566 = vpop.f32.mrf.mxu0
        %v567 = vadd.f32 %v208, %v566
        %568 = vdwg.mxu0
        %569 = vmatprep.subr.mxu0 0.0
        %570 = vmatpush1.msra.mxu0 0.0
        %571 = vmatprep.subr.mxu0 0.0
        %572 = vmatpush1.msra.mxu0 0.0
        %573 = vmatprep.subr.mxu0 0.0
        %574 = vmatpush1.msra.mxu0 0.0
        %575 = vmatprep.subr.mxu0 0.0
        %576 = vmatpush1.msra.mxu0 0.0
        %577 = vmatprep.subr.mxu0 0.0
        %578 = vmatpush1.msra.mxu0 0.0
        %579 = vmatprep.subr.mxu0 0.0
        %580 = vmatpush1.msra.mxu0 0.0
        %581 = vmatprep.subr.mxu0 0.0
        %582 = vmatpush1.msra.mxu0 0.0
        %583 = vmatprep.subr.mxu0 0.0
        %584 = vmatpush1.msra.mxu0 0.0
        %585 = vmatprep.subr.mxu0 0.0
        %586 = vmatpush1.msra.mxu0 0.0
        %587 = vmatprep.subr.mxu0 0.0
        %588 = vmatpush1.msra.mxu0 0.0
        %589 = vmatprep.subr.mxu0 0.0
        %590 = vmatpush1.msra.mxu0 0.0
        %591 = vmatprep.subr.mxu0 0.0
        %592 = vmatpush1.msra.mxu0 0.0
        %593 = vmatprep.subr.mxu0 0.0
        %594 = vmatpush1.msra.mxu0 0.0
        %595 = vmatprep.subr.mxu0 0.0
        %596 = vmatpush1.msra.mxu0 0.0
        %597 = vmatprep.subr.mxu0 0.0
        %598 = vmatpush1.msra.mxu0 0.0
        %599 = vmatprep.subr.mxu0 %v198
        %600 = vmatpush1.msra.mxu0 %v197
        %601 = vmatprep.subr.mxu0 0.0
        %602 = vmatpush2.msra.mxu0 0.0
        %603 = vmatprep.subr.mxu0 0.0
        %604 = vmatpush2.msra.mxu0 0.0
        %605 = vmatprep.subr.mxu0 0.0
        %606 = vmatpush2.msra.mxu0 0.0
        %607 = vmatprep.subr.mxu0 0.0
        %608 = vmatpush2.msra.mxu0 0.0
        %609 = vmatprep.subr.mxu0 0.0
        %610 = vmatpush2.msra.mxu0 0.0
        %611 = vmatprep.subr.mxu0 0.0
        %612 = vmatpush2.msra.mxu0 0.0
        %613 = vmatprep.subr.mxu0 0.0
        %614 = vmatpush2.msra.mxu0 0.0
        %615 = vmatprep.subr.mxu0 0.0
        %616 = vmatpush2.msra.mxu0 0.0
        %617 = vmatprep.subr.mxu0 0.0
        %618 = vmatpush2.msra.mxu0 0.0
        %619 = vmatprep.subr.mxu0 0.0
        %620 = vmatpush2.msra.mxu0 0.0
        %621 = vmatprep.subr.mxu0 0.0
        %622 = vmatpush2.msra.mxu0 0.0
        %623 = vmatprep.subr.mxu0 0.0
        %624 = vmatpush2.msra.mxu0 0.0
        %625 = vmatprep.subr.mxu0 0.0
        %626 = vmatpush2.msra.mxu0 0.0
        %627 = vmatprep.subr.mxu0 0.0
        %628 = vmatpush2.msra.mxu0 0.0
        %629 = vmatprep.subr.mxu0 0.0
        %630 = vmatpush2.msra.mxu0 0.0
        %631 = vmatprep.subr.mxu0 0.0
        %632 = vmatpush2.msra.mxu0 0.0
        %633 = vmatprep.mubr.f32.mxu0 0.0
        %634 = vmatmul.mubr.f32.gmra.mxu0 %v212
        %v635 = vpop.f32.mrf.mxu0
        %v636 = vadd.f32 %v208, %v635
        %v637 = vpop.f32.mrf.mxu0
        %v638 = vadd.f32 %v208, %v637
        %639 = vdwg.mxu0
        %640 = vmatprep.subr.mxu0 0.0
        %641 = vmatpush1.msra.mxu0 0.0
        %642 = vmatprep.subr.mxu0 0.0
        %643 = vmatpush1.msra.mxu0 0.0
        %644 = vmatprep.subr.mxu0 0.0
        %645 = vmatpush1.msra.mxu0 0.0
        %646 = vmatprep.subr.mxu0 0.0
        %647 = vmatpush1.msra.mxu0 0.0
        %648 = vmatprep.subr.mxu0 0.0
        %649 = vmatpush1.msra.mxu0 0.0
        %650 = vmatprep.subr.mxu0 0.0
        %651 = vmatpush1.msra.mxu0 0.0
        %652 = vmatprep.subr.mxu0 0.0
        %653 = vmatpush1.msra.mxu0 0.0
        %654 = vmatprep.subr.mxu0 0.0
        %655 = vmatpush1.msra.mxu0 0.0
        %656 = vmatprep.subr.mxu0 0.0
        %657 = vmatpush1.msra.mxu0 0.0
        %658 = vmatprep.subr.mxu0 0.0
        %659 = vmatpush1.msra.mxu0 0.0
        %660 = vmatprep.subr.mxu0 0.0
        %661 = vmatpush1.msra.mxu0 0.0
        %662 = vmatprep.subr.mxu0 0.0
        %663 = vmatpush1.msra.mxu0 0.0
        %664 = vmatprep.subr.mxu0 0.0
        %665 = vmatpush1.msra.mxu0 0.0
        %666 = vmatprep.subr.mxu0 0.0
        %667 = vmatpush1.msra.mxu0 0.0
        %668 = vmatprep.subr.mxu0 0.0
        %669 = vmatpush1.msra.mxu0 0.0
        %670 = vmatprep.subr.mxu0 %v200
        %671 = vmatpush1.msra.mxu0 %v199
        %672 = vmatprep.subr.mxu0 0.0
        %673 = vmatpush2.msra.mxu0 0.0
        %674 = vmatprep.subr.mxu0 0.0
        %675 = vmatpush2.msra.mxu0 0.0
        %676 = vmatprep.subr.mxu0 0.0
        %677 = vmatpush2.msra.mxu0 0.0
        %678 = vmatprep.subr.mxu0 0.0
        %679 = vmatpush2.msra.mxu0 0.0
        %680 = vmatprep.subr.mxu0 0.0
        %681 = vmatpush2.msra.mxu0 0.0
        %682 = vmatprep.subr.mxu0 0.0
        %683 = vmatpush2.msra.mxu0 0.0
        %684 = vmatprep.subr.mxu0 0.0
        %685 = vmatpush2.msra.mxu0 0.0
        %686 = vmatprep.subr.mxu0 0.0
        %687 = vmatpush2.msra.mxu0 0.0
        %688 = vmatprep.subr.mxu0 0.0
        %689 = vmatpush2.msra.mxu0 0.0
        %690 = vmatprep.subr.mxu0 0.0
        %691 = vmatpush2.msra.mxu0 0.0
        %692 = vmatprep.subr.mxu0 0.0
        %693 = vmatpush2.msra.mxu0 0.0
        %694 = vmatprep.subr.mxu0 0.0
        %695 = vmatpush2.msra.mxu0 0.0
        %696 = vmatprep.subr.mxu0 0.0
        %697 = vmatpush2.msra.mxu0 0.0
        %698 = vmatprep.subr.mxu0 0.0
        %699 = vmatpush2.msra.mxu0 0.0
        %700 = vmatprep.subr.mxu0 0.0
        %701 = vmatpush2.msra.mxu0 0.0
        %702 = vmatprep.subr.mxu0 0.0
        %703 = vmatpush2.msra.mxu0 0.0
        %704 = vmatprep.mubr.f32.mxu0 0.0
        %705 = vmatmul.mubr.f32.gmra.mxu0 %v212
        %v706 = vpop.f32.mrf.mxu0
        %v707 = vadd.f32 %v208, %v706
        %v708 = vpop.f32.mrf.mxu0
        %v709 = vadd.f32 %v208, %v708
        %710 = vdwg.mxu0
        %711 = vmatprep.subr.mxu0 0.0
        %712 = vmatpush1.msra.mxu0 0.0
        %713 = vmatprep.subr.mxu0 0.0
        %714 = vmatpush1.msra.mxu0 0.0
        %715 = vmatprep.subr.mxu0 0.0
        %716 = vmatpush1.msra.mxu0 0.0
        %717 = vmatprep.subr.mxu0 0.0
        %718 = vmatpush1.msra.mxu0 0.0
        %719 = vmatprep.subr.mxu0 0.0
        %720 = vmatpush1.msra.mxu0 0.0
        %721 = vmatprep.subr.mxu0 0.0
        %722 = vmatpush1.msra.mxu0 0.0
        %723 = vmatprep.subr.mxu0 0.0
        %724 = vmatpush1.msra.mxu0 0.0
        %725 = vmatprep.subr.mxu0 0.0
        %726 = vmatpush1.msra.mxu0 0.0
        %727 = vmatprep.subr.mxu0 0.0
        %728 = vmatpush1.msra.mxu0 0.0
        %729 = vmatprep.subr.mxu0 0.0
        %730 = vmatpush1.msra.mxu0 0.0
        %731 = vmatprep.subr.mxu0 0.0
        %732 = vmatpush1.msra.mxu0 0.0
        %733 = vmatprep.subr.mxu0 0.0
        %734 = vmatpush1.msra.mxu0 0.0
        %735 = vmatprep.subr.mxu0 0.0
        %736 = vmatpush1.msra.mxu0 0.0
        %737 = vmatprep.subr.mxu0 0.0
        %738 = vmatpush1.msra.mxu0 0.0
        %739 = vmatprep.subr.mxu0 0.0
        %740 = vmatpush1.msra.mxu0 0.0
        %741 = vmatprep.subr.mxu0 %v202
        %742 = vmatpush1.msra.mxu0 %v201
        %743 = vmatprep.subr.mxu0 0.0
        %744 = vmatpush2.msra.mxu0 0.0
        %745 = vmatprep.subr.mxu0 0.0
        %746 = vmatpush2.msra.mxu0 0.0
        %747 = vmatprep.subr.mxu0 0.0
        %748 = vmatpush2.msra.mxu0 0.0
        %749 = vmatprep.subr.mxu0 0.0
        %750 = vmatpush2.msra.mxu0 0.0
        %751 = vmatprep.subr.mxu0 0.0
        %752 = vmatpush2.msra.mxu0 0.0
        %753 = vmatprep.subr.mxu0 0.0
        %754 = vmatpush2.msra.mxu0 0.0
        %755 = vmatprep.subr.mxu0 0.0
        %756 = vmatpush2.msra.mxu0 0.0
        %757 = vmatprep.subr.mxu0 0.0
        %758 = vmatpush2.msra.mxu0 0.0
        %759 = vmatprep.subr.mxu0 0.0
        %760 = vmatpush2.msra.mxu0 0.0
        %761 = vmatprep.subr.mxu0 0.0
        %762 = vmatpush2.msra.mxu0 0.0
        %763 = vmatprep.subr.mxu0 0.0
        %764 = vmatpush2.msra.mxu0 0.0
        %765 = vmatprep.subr.mxu0 0.0
        %766 = vmatpush2.msra.mxu0 0.0
        %767 = vmatprep.subr.mxu0 0.0
        %768 = vmatpush2.msra.mxu0 0.0
        %769 = vmatprep.subr.mxu0 0.0
        %770 = vmatpush2.msra.mxu0 0.0
        %771 = vmatprep.subr.mxu0 0.0
        %772 = vmatpush2.msra.mxu0 0.0
        %773 = vmatprep.subr.mxu0 0.0
        %774 = vmatpush2.msra.mxu0 0.0
        %775 = vmatprep.mubr.f32.mxu0 0.0
        %776 = vmatmul.mubr.f32.gmra.mxu0 %v212
        %v777 = vpop.f32.mrf.mxu0
        %v778 = vadd.f32 %v208, %v777
        %v779 = vpop.f32.mrf.mxu0
        %v780 = vadd.f32 %v208, %v779
        %781 = vdwg.mxu0
        %782 = vst [vmem:[%s186] sm:$0xff] %v281
        %783 = vst [vmem:[%s186 + $0x8] sm:$0xff] %v283
        %784 = vst [vmem:[%s186 + $0x10] sm:$0xff] %v352
        %785 = vst [vmem:[%s186 + $0x18] sm:$0xff] %v354
        %786 = vst [vmem:[%s186 + $0x20] sm:$0xff] %v423
        %787 = vst [vmem:[%s186 + $0x28] sm:$0xff] %v425
        %788 = vst [vmem:[%s186 + $0x30] sm:$0xff] %v494
        %789 = vst [vmem:[%s186 + $0x38] sm:$0xff] %v496
        %790 = vst [vmem:[%s186 + $0x40] sm:$0xff] %v565
        %791 = vst [vmem:[%s186 + $0x48] sm:$0xff] %v567
        %792 = vst [vmem:[%s186 + $0x50] sm:$0xff] %v636
        %793 = vst [vmem:[%s186 + $0x58] sm:$0xff] %v638
        %794 = vst [vmem:[%s186 + $0x60] sm:$0xff] %v707
        %795 = vst [vmem:[%s186 + $0x68] sm:$0xff] %v709
        %796 = vst [vmem:[%s186 + $0x70] sm:$0xff] %v778
        %797 = vst [vmem:[%s186 + $0x78] sm:$0xff] %v780
        %798 = vst [vmem:[%s186 + $0x80] sm:$0xff] %v187
        %799 = vst [vmem:[%s186 + $0x88] sm:$0xff] %v188
        %800 = vst [vmem:[%s186 + $0x90] sm:$0xff] %v189
        %801 = vst [vmem:[%s186 + $0x98] sm:$0xff] %v190
        %802 = vst [vmem:[%s186 + $0xa0] sm:$0xff] %v191
        %803 = vst [vmem:[%s186 + $0xa8] sm:$0xff] %v192
        %804 = vst [vmem:[%s186 + $0xb0] sm:$0xff] %v193
        %805 = vst [vmem:[%s186 + $0xb8] sm:$0xff] %v194
        %806 = vst [vmem:[%s186 + $0xc0] sm:$0xff] %v195
        %807 = vst [vmem:[%s186 + $0xc8] sm:$0xff] %v196
        %808 = vst [vmem:[%s186 + $0xd0] sm:$0xff] %v197
        %809 = vst [vmem:[%s186 + $0xd8] sm:$0xff] %v198
        %810 = vst [vmem:[%s186 + $0xe0] sm:$0xff] %v199
        %811 = vst [vmem:[%s186 + $0xe8] sm:$0xff] %v200
        %812 = vst [vmem:[%s186 + $0xf0] sm:$0xff] %v201
        %813 = vst [vmem:[%s186 + $0xf8] sm:$0xff] %v202
        %s814 = sand.u32 %s96, 1
        %s815 = scalar_lea.sflag [#allocation4], %s814
        %s816 = sand.u32 %s96, 1
        %s817 = smul.addr %s816, 256
        %s818 = scalar_lea.vmem [#allocation5], %s817
        // Predicated region
        $region37: #{tpu_custom_call.1} parent=31 // pred_check
          %p819 = pneg %p106
        $region38: #{tpu_custom_call.1} parent=31 // pred_check_branch
          %821 = sbr.rel (%p819) target = $region40
        $region39: #{tpu_custom_call.1} parent=31 // pred_region
          %s823 = ssub.s32 4096, 4096
          %824 = vsyncadd %s815, %s823
          %s825 = smul.addr %s20, 32
          %s826 = smul.addr %s825, 128
          %s827 = scalar_lea.hbm %s3, %s826
          %s828 = sshll.u32 %s818, 4
          %s829 = int_to_ptr.vmem [resolvable:$true] %s828
          %834 = dma.vmem_to_hbm [thread:$0]  %s829, 4096, %s827, %s815, 2048, 2048, 128
        $region40: #{tpu_custom_call.1} parent=31 // pred_fallthru
          _
      $region32: #{tpu_custom_call.1} parent=5 // pred_fallthru
        _
      %p835 = scmp.le.s32.totalorder 2, %s15
      // Predicated region
      $region41: #{tpu_custom_call.1} parent=5 // pred_check
        %p836 = pneg %p835
      $region42: #{tpu_custom_call.1} parent=5 // pred_check_branch
        %838 = sbr.rel (%p836) target = $region44
      $region43: #{tpu_custom_call.1} parent=5 // pred_region
        %s839 = ssub.s32 %s15, 2
        // Predicated region
        $region45: #{tpu_custom_call.1} parent=43 // pred_check
          %p840 = pneg %p112
        $region46: #{tpu_custom_call.1} parent=43 // pred_check_branch
          %842 = sbr.rel (%p840) target = $region48
        $region47: #{tpu_custom_call.1} parent=43 // pred_region
          %s843 = sand.u32 %s97, 1
          %s844 = scalar_lea.sflag [#allocation4], %s843
          %s845 = sand.u32 %s97, 1
          %s846 = smul.addr %s845, 256
          %s847 = scalar_lea.vmem [#allocation5], %s846
          %848 = dma.done %s844, 4096
        $region48: #{tpu_custom_call.1} parent=43 // pred_fallthru
          _
      $region44: #{tpu_custom_call.1} parent=5 // pred_fallthru
        _
    $region6: #{tpu_custom_call.1} parent=1 // loop_footer
      %s19 = sadd.s32 1, %s15
    $region7: #{tpu_custom_call.1} parent=1 // loop_footer_branch
      %14 = sbr.rel target = $region3
    $region8: #{tpu_custom_call.1} parent=1 // loop_exit
      _
    %849 = vsyncpa [#allocation3], 1
    %s850 = scalar_lea.sflag [#allocation3], 1
    %851 = vsyncpa %s850, 1
    %852 = vsyncpa [#allocation4], 1
    %s853 = scalar_lea.sflag [#allocation4], 1
    %854 = vsyncpa %s853, 1

</llo_original>
